<compile_context>
chip_gen: v6e
topology: v6e:2x2x1
jax: 0.10.0
libtpu: 0.0.40
codegen_flags: <defaults>
</compile_context>

<pallas_src>
import functools

import jax
import jax.numpy as jnp
from jax.experimental import pallas as pl
from jax.experimental.pallas import tpu as pltpu


def _round_up(x: int, m: int) -> int:
    return ((x + m - 1) // m) * m


def _cdiv(a: int, b: int) -> int:
    return (a + b - 1) // b


def _sublane(dtype) -> int:
    # Minimum second-to-last-dim granule per element width: f32 -> 8, bf16 -> 16, int8/fp8 -> 32.
    return {4: 8, 2: 16, 1: 32}.get(jnp.dtype(dtype).itemsize, 8)


def _pick_tile(limit: int, total: int, unit: int) -> int:
    """Largest multiple of `unit` that divides `total` (a multiple of `unit`) and is <= limit."""
    best = unit
    t = unit
    cap = min(limit, total)
    while t <= cap:
        if total % t == 0:
            best = t
        t += unit
    return best


def _vmem_budget_and_limit():
    """Generation-aware VMEM tile budget and scoped-VMEM limit (bytes)."""
    try:
        kind = jax.devices()[0].device_kind.lower()
    except Exception:  # pragma: no cover - defensive; fall back to conservative budget
        kind = ""
    if "v5" in kind or "v6" in kind:
        # 128 MiB physical VMEM per core: push tiles hard (worst MXU:HBM ratio on v6e).
        return 80 * 1024 * 1024, 96 * 1024 * 1024
    # v7x (64 MiB physical VMEM) and anything unknown: stay conservative.
    return 36 * 1024 * 1024, 48 * 1024 * 1024


def _tile_vmem_bytes(tm, tn, tk, x_item, w_item, b_item, o_item, use_scratch):
    # Double-buffered input / output windows + optional f32 accumulator scratch.
    total = 2 * (tm * tk * x_item + tk * tn * w_item + tn * b_item)
    total += 2 * tm * tn * o_item
    if use_scratch:
        total += tm * tn * 4
    return total


def _make_kernel(cast_bf16: bool, use_scratch: bool):
    def kernel(x_ref, w_ref, b_ref, o_ref, *scratch):
        # x_ref: (tm, tk), w_ref: (tk, tn), b_ref: (1, tn), o_ref: (tm, tn)
        acc_ref = scratch[0] if use_scratch else o_ref  # f32 accumulator
        k = pl.program_id(2)

        @pl.when(k == 0)
        def _init():
            # Initialize the accumulator with the bias (added exactly once).
            acc_ref[...] = jnp.broadcast_to(
                b_ref[...].astype(acc_ref.dtype), acc_ref.shape
            )

        a = x_ref[...]
        w = w_ref[...]
        if cast_bf16:
            # Feed the MXU its native bf16 operands; accumulate in f32.
            a = a.astype(jnp.bfloat16)
            w = w.astype(jnp.bfloat16)
        acc_ref[...] += jnp.dot(a, w, preferred_element_type=jnp.float32)

        if use_scratch:
            @pl.when(k == pl.num_programs(2) - 1)
            def _finalize():
                o_ref[...] = acc_ref[...].astype(o_ref.dtype)

    return kernel


@functools.partial(jax.jit, static_argnames=("tm", "tn", "tk", "mxu_bf16"))
def conv1d(x, weight, bias, *, tm: int = 512, tn: int = 1024, tk: int = 1024,
           mxu_bf16: bool = True):
    """GPT Conv1D forward: (..., nx) -> (..., nf), out = x @ weight + bias.

    mxu_bf16=True casts MXU operands to bf16 (f32 accumulation) for 2-4x MXU
    throughput; set mxu_bf16=False for bit-faithful f32 matmul semantics.
    """
    nx, nf = weight.shape
    orig_shape = x.shape
    assert orig_shape[-1] == nx

    x2d = x.reshape(-1, nx)
    M = x2d.shape[0]

    out_dtype = x.dtype
    x_item = jnp.dtype(x.dtype).itemsize
    w_item = jnp.dtype(weight.dtype).itemsize
    b_item = jnp.dtype(bias.dtype).itemsize
    o_item = jnp.dtype(out_dtype).itemsize
    use_scratch = jnp.dtype(out_dtype) != jnp.dtype(jnp.float32)

    budget, vmem_limit = _vmem_budget_and_limit()

    # ---- tile selection -----------------------------------------------------
    # K and N are handled at 128-granularity; tiles are exact divisors of the
    # (possibly padded) K/N extents so the reduction axis is covered exactly and
    # no padding is needed for 128-aligned GPT shapes.
    Kp = _round_up(nx, 128)
    Np = _round_up(nf, 128)
    m_gran = max(_sublane(x.dtype), _sublane(out_dtype))

    tm_e = _round_up(min(tm, _round_up(M, m_gran)), m_gran)
    tn_e = _pick_tile(min(tn, Np), Np, 128)
    tk_e = _pick_tile(min(tk, Kp), Kp, 128)

    def fits(tm_, tn_, tk_):
        return _tile_vmem_bytes(tm_, tn_, tk_, x_item, w_item, b_item, o_item,
                                use_scratch) <= budget

    # Shrink only if the requested tiles exceed the generation's VMEM budget.
    while not fits(tm_e, tn_e, tk_e):
        if tn_e > 128:
            tn_e = _pick_tile(tn_e // 2, Np, 128)
        elif tk_e > 128:
            tk_e = _pick_tile(tk_e // 2, Kp, 128)
        elif tm_e > m_gran:
            tm_e = max(m_gran, _round_up(tm_e // 2, m_gran))
        else:
            break

    # Grow: full-width output tiles (stream x from HBM exactly once) when VMEM allows.
    if Np > tn_e and fits(tm_e, Np, tk_e):
        tn_e = Np
    # Grow: fewer reduction steps (less per-step overhead / fewer acc RMWs) when VMEM allows.
    if Kp > tk_e:
        tk_big = _pick_tile(min(Kp, 2048), Kp, 128)
        if tk_big > tk_e and fits(tm_e, tn_e, tk_big):
            tk_e = tk_big

    # ---- padding (only where required) --------------------------------------
    # Zero-pad K so padded columns multiply zero weights (reduction correctness).
    # No padding along M; the (rare) unaligned-nf case pads W/bias once here.
    # TODO(synk): in a full model, pad weight/bias once at parameter-load time
    # instead of per call.
    xp = x2d if Kp == nx else jnp.pad(x2d, ((0, 0), (0, Kp - nx)))
    wp = weight if (Kp, Np) == (nx, nf) else jnp.pad(
        weight, ((0, Kp - nx), (0, Np - nf)))
    bp = bias.reshape(1, nf)
    if Np != nf:
        bp = jnp.pad(bp, ((0, 0), (0, Np - nf)))

    grid = (_cdiv(M, tm_e), Np // tn_e, Kp // tk_e)
    Gm, Gn, Gk = grid

    # Accurate advisory cost: x re-read Gn times, W/bias re-read Gm times.
    cost = pl.CostEstimate(
        flops=2 * M * Kp * Np,
        transcendentals=0,
        bytes_accessed=(M * Kp * x_item) * Gn
        + (Kp * Np * w_item + Np * b_item) * Gm
        + M * Np * o_item,
    )

    scratch_shapes = (
        [pltpu.VMEM((tm_e, tn_e), jnp.float32)] if use_scratch else []
    )

    out = pl.pallas_call(
        _make_kernel(bool(mxu_bf16), use_scratch),
        out_shape=jax.ShapeDtypeStruct((M, Np), out_dtype),
        grid_spec=pltpu.PrefetchScalarGridSpec(
            num_scalar_prefetch=0,
            grid=grid,
            in_specs=[
                pl.BlockSpec((tm_e, tk_e), lambda i, j, k: (i, k)),
                pl.BlockSpec((tk_e, tn_e), lambda i, j, k: (k, j)),
                pl.BlockSpec((1, tn_e), lambda i, j, k: (0, j)),
            ],
            out_specs=pl.BlockSpec((tm_e, tn_e), lambda i, j, k: (i, j)),
            scratch_shapes=scratch_shapes,
        ),
        compiler_params=pltpu.CompilerParams(
            dimension_semantics=("parallel", "parallel", "arbitrary"),
            vmem_limit_bytes=vmem_limit,
        ),
        cost_estimate=cost,
    )(xp, wp, bp)

    if Np != nf:
        out = out[:, :nf]
    return out.reshape(orig_shape[:-1] + (nf,))


if __name__ == "__main__":
    # Module __init__(nf, nx): weight (nx, nf) ~ N(0, 0.02), bias (nf,) zeros.
    key = jax.random.PRNGKey(0)
    kx, kw = jax.random.split(key)

    # 1) Small shape, exact f32 MXU path (bit-faithful module semantics).
    batch, seq, nx, nf = 2, 8, 32, 64
    x = jax.random.normal(kx, (batch, seq, nx), dtype=jnp.float32)
    weight = 0.02 * jax.random.normal(kw, (nx, nf), dtype=jnp.float32)
    bias = jnp.zeros((nf,), dtype=jnp.float32)

    out = conv1d(x, weight, bias, mxu_bf16=False)
    jax.block_until_ready(out)
    ref = (x.reshape(-1, nx) @ weight + bias).reshape(batch, seq, nf)
    assert out.shape == (batch, seq, nf)
    assert jnp.allclose(out, ref, atol=1e-5, rtol=1e-5)

    # 2) Larger, non-aligned shape with the default bf16-MXU fast path.
    b2, s2, nx2, nf2 = 3, 70, 384, 200
    k1, k2 = jax.random.split(kw)
    x2 = jax.random.normal(k1, (b2, s2, nx2), dtype=jnp.float32)
    w2 = 0.02 * jax.random.normal(k2, (nx2, nf2), dtype=jnp.float32)
    bsz2 = 0.01 * jnp.arange(nf2, dtype=jnp.float32)
    out2 = conv1d(x2, w2, bsz2)  # mxu_bf16=True (default)
    jax.block_until_ready(out2)
    ref2 = (x2.reshape(-1, nx2) @ w2 + bsz2).reshape(b2, s2, nf2)
    assert jnp.allclose(out2, ref2, atol=3e-2, rtol=3e-2)

    # 3) bf16 activations/weights end-to-end (exercises the f32 scratch + cast path).
    b3, s3, nx3, nf3 = 2, 16, 256, 128
    k3, k4 = jax.random.split(k2)
    x3 = jax.random.normal(k3, (b3, s3, nx3), dtype=jnp.bfloat16)
    w3 = (0.02 * jax.random.normal(k4, (nx3, nf3), dtype=jnp.float32)).astype(jnp.bfloat16)
    b3s = jnp.zeros((nf3,), dtype=jnp.float32)
    out3 = conv1d(x3, w3, b3s)
    jax.block_until_ready(out3)
    ref3 = (x3.astype(jnp.float32).reshape(-1, nx3) @ w3.astype(jnp.float32)
            + b3s).reshape(b3, s3, nf3)
    assert out3.dtype == jnp.bfloat16
    assert jnp.allclose(out3.astype(jnp.float32), ref3, atol=5e-2, rtol=5e-2)

    print("KERNEL_OK")
</pallas_src>

<mosaic_0001>
module attributes {stable_mosaic.version = 11 : i64} {
  func.func @kernel(%arg0: i32, %arg1: i32, %arg2: i32, %arg3: memref<16x128xf32, #tpu.memory_space<vmem>>, %arg4: memref<128x128xf32, #tpu.memory_space<vmem>>, %arg5: memref<1x128xf32, #tpu.memory_space<vmem>>, %arg6: memref<16x128xf32, #tpu.memory_space<vmem>>) attributes {dimension_semantics = [#tpu.dimension_semantics<parallel>, #tpu.dimension_semantics<parallel>, #tpu.dimension_semantics<arbitrary>], iteration_bounds = array<i64: 1, 1, 1>, scalar_prefetch = 0 : i64, scratch_operands = 0 : i64, tpu.core_type = #tpu.core_type<tc>, window_params = [{transform_indices = @transform_0, window_bounds = array<i64: 16, 128>}, {transform_indices = @transform_1, window_bounds = array<i64: 128, 128>}, {transform_indices = @transform_2, window_bounds = array<i64: 1, 128>}, {transform_indices = @transform_3, window_bounds = array<i64: 16, 128>}]} {
    %c0_i32 = arith.constant 0 : i32
    %0 = arith.cmpi eq, %arg2, %c0_i32 : i32
    %1 = arith.extui %0 : i1 to i32
    %c0_i32_0 = arith.constant 0 : i32
    %2 = arith.cmpi ne, %1, %c0_i32_0 : i32
    scf.if %2 {
      %c0_8 = arith.constant 0 : index
      %c0_9 = arith.constant 0 : index
      %9 = vector.load %arg5[%c0_8, %c0_9] : memref<1x128xf32, #tpu.memory_space<vmem>>, vector<1x128xf32>
      %10 = vector.shape_cast %9 : vector<1x128xf32> to vector<1x128xf32>
      %11 = vector.broadcast %10 : vector<1x128xf32> to vector<16x128xf32>
      %c0_10 = arith.constant 0 : index
      %c0_11 = arith.constant 0 : index
      %12 = vector.load %arg6[%c0_10, %c0_11] : memref<16x128xf32, #tpu.memory_space<vmem>>, vector<16x128xf32>
      tpu.vector_store %arg6[%c0_10, %c0_11], %11 {strides = array<i32>} : memref<16x128xf32, #tpu.memory_space<vmem>>, vector<16x128xf32>,
    } else {
    }
    %c0 = arith.constant 0 : index
    %c0_1 = arith.constant 0 : index
    %3 = vector.load %arg3[%c0, %c0_1] : memref<16x128xf32, #tpu.memory_space<vmem>>, vector<16x128xf32>
    %c0_2 = arith.constant 0 : index
    %c0_3 = arith.constant 0 : index
    %4 = vector.load %arg4[%c0_2, %c0_3] : memref<128x128xf32, #tpu.memory_space<vmem>>, vector<128x128xf32>
    %c0_4 = arith.constant 0 : index
    %c0_5 = arith.constant 0 : index
    %5 = vector.load %arg6[%c0_4, %c0_5] : memref<16x128xf32, #tpu.memory_space<vmem>>, vector<16x128xf32>
    %cst = arith.constant dense<0.000000e+00> : vector<16x128xf32>
    %6 = tpu.matmul %3, %4, %cst {dimension_numbers = #tpu.dot_dimension_numbers<[1], [0], [0], [1], [0, 0, 1, 1], [], []>} : vector<16x128xf32>, vector<128x128xf32>, vector<16x128xf32> -> vector<16x128xf32>
    %7 = arith.addf %5, %6 : vector<16x128xf32>
    %c0_6 = arith.constant 0 : index
    %c0_7 = arith.constant 0 : index
    %8 = vector.load %arg6[%c0_6, %c0_7] : memref<16x128xf32, #tpu.memory_space<vmem>>, vector<16x128xf32>
    tpu.vector_store %arg6[%c0_6, %c0_7], %7 {strides = array<i32>} : memref<16x128xf32, #tpu.memory_space<vmem>>, vector<16x128xf32>,
    return
  }
  func.func @transform_0(%arg0: i32, %arg1: i32, %arg2: i32) -> (i32, i32) {
    %c0_i32 = arith.constant 0 : i32
    return %arg0, %arg2 : i32, i32
  }
  func.func @transform_1(%arg0: i32, %arg1: i32, %arg2: i32) -> (i32, i32) {
    %c0_i32 = arith.constant 0 : i32
    return %arg2, %arg1 : i32, i32
  }
  func.func @transform_2(%arg0: i32, %arg1: i32, %arg2: i32) -> (i32, i32) {
    %c0_i32 = arith.constant 0 : i32
    %c0_i32_0 = arith.constant 0 : i32
    return %c0_i32, %arg1 : i32, i32
  }
  func.func @transform_3(%arg0: i32, %arg1: i32, %arg2: i32) -> (i32, i32) {
    %c0_i32 = arith.constant 0 : i32
    return %arg0, %arg1 : i32, i32
  }
}

</mosaic_0001>

<llo_original>
// kernel: conv1d.1
$region0: #{conv1d.1}
  #allocation0 [shape = 'u32[]', space=smem, size = 0x4, offset = 0x4, fixed_abs, tag = 'smem constant byte address 0x4 - core index']
  #allocation1 [shape = 'u32[144,128]{1,0:T(1,128)}', space=vmem, size = 0x12000, scoped, tag = 'internal scratch']
  %s0 = inlined_call_operand.vmem [shape: f32[16,128], index: 0, kind: input, shape index: {}]
  %s1 = inlined_call_operand.vmem [shape: f32[128,128], index: 1, kind: input, shape index: {}]
  %s2 = inlined_call_operand.vmem [shape: f32[1,128], index: 2, kind: input, shape index: {}]
  %s3 = inlined_call_operand.vmem [shape: f32[16,128], index: 3, kind: output, shape index: {}]
  %s4 = sld [smem:[#allocation0]]
  $region26: #{conv1d.1} parent=0
    _
  %s6 = ssub.s32 1, %s4
  %s7 = scalar_select 0, %s6, %s4
  // Predicated region
  $region2: #{conv1d.1} parent=0 // pred_check
    _
  $region3: #{conv1d.1} parent=0 // pred_check_branch
    %9 = sbr.rel (0) target = $region5
  $region4: #{conv1d.1} parent=0 // pred_region
    _
  $region5: #{conv1d.1} parent=0 // pred_fallthru
    _
  // Predicated region
  $region6: #{conv1d.1} parent=0 // pred_check
    _
  $region7: #{conv1d.1} parent=0 // pred_check_branch
    %11 = sbr.rel (0) target = $region9
  $region8: #{conv1d.1} parent=0 // pred_region
    _
  $region9: #{conv1d.1} parent=0 // pred_fallthru
    _
  // Predicated region
  $region10: #{conv1d.1} parent=0 // pred_check
    _
  $region11: #{conv1d.1} parent=0 // pred_check_branch
    %13 = sbr.rel (0) target = $region13
  $region12: #{conv1d.1} parent=0 // pred_region
    _
  $region13: #{conv1d.1} parent=0 // pred_fallthru
    _
  %p14 = scmp.eq.s32.totalorder 0, 0
  // Predicated region
  $region14: #{conv1d.1} parent=0 // pred_check
    %p15 = pneg %p14
  $region15: #{conv1d.1} parent=0 // pred_check_branch
    %17 = sbr.rel (%p15) target = $region17
  $region16: #{conv1d.1} parent=0 // pred_region
    %v18 = vld [vmem:[%s2] sm:$0x1]
    %v20 = vlaneseq
    %v21 = vshrl.u32 %v20, 7
    %v22 = vsub.s32 0, %v21
    %v23 = vrot.slane %v18, %v22
    %25 = vst [vmem:[%s3] sm:$0xff] %v23
    %26 = vst [vmem:[%s3 + $0x8] sm:$0xff] %v23
  $region17: #{conv1d.1} parent=0 // pred_fallthru
    _
  %v27 = vld [vmem:[%s0] sm:$0xff]
  %v28 = vld [vmem:[%s0 + $0x8] sm:$0xff]
  %v29 = vld [vmem:[%s1] sm:$0xff]
  %v30 = vld [vmem:[%s1 + $0x8] sm:$0xff]
  %v31 = vld [vmem:[%s1 + $0x10] sm:$0xff]
  %v32 = vld [vmem:[%s1 + $0x18] sm:$0xff]
  %v33 = vld [vmem:[%s1 + $0x20] sm:$0xff]
  %v34 = vld [vmem:[%s1 + $0x28] sm:$0xff]
  %v35 = vld [vmem:[%s1 + $0x30] sm:$0xff]
  %v36 = vld [vmem:[%s1 + $0x38] sm:$0xff]
  %v37 = vld [vmem:[%s1 + $0x40] sm:$0xff]
  %v38 = vld [vmem:[%s1 + $0x48] sm:$0xff]
  %v39 = vld [vmem:[%s1 + $0x50] sm:$0xff]
  %v40 = vld [vmem:[%s1 + $0x58] sm:$0xff]
  %v41 = vld [vmem:[%s1 + $0x60] sm:$0xff]
  %v42 = vld [vmem:[%s1 + $0x68] sm:$0xff]
  %v43 = vld [vmem:[%s1 + $0x70] sm:$0xff]
  %v44 = vld [vmem:[%s1 + $0x78] sm:$0xff]
  %v45 = vld [vmem:[%s3] sm:$0xff]
  %v46 = vld [vmem:[%s3 + $0x8] sm:$0xff]
  %47 = vmatprep.subr.mxu0 0.0
  %48 = vmatpush1.msra.mxu0 %v44
  %49 = vmatprep.subr.mxu0 0.0
  %50 = vmatpush1.msra.mxu0 %v43
  %51 = vmatprep.subr.mxu0 0.0
  %52 = vmatpush1.msra.mxu0 %v42
  %53 = vmatprep.subr.mxu0 0.0
  %54 = vmatpush1.msra.mxu0 %v41
  %55 = vmatprep.subr.mxu0 0.0
  %56 = vmatpush1.msra.mxu0 %v40
  %57 = vmatprep.subr.mxu0 0.0
  %58 = vmatpush1.msra.mxu0 %v39
  %59 = vmatprep.subr.mxu0 0.0
  %60 = vmatpush1.msra.mxu0 %v38
  %61 = vmatprep.subr.mxu0 0.0
  %62 = vmatpush1.msra.mxu0 %v37
  %63 = vmatprep.subr.mxu0 0.0
  %64 = vmatpush1.msra.mxu0 %v36
  %65 = vmatprep.subr.mxu0 0.0
  %66 = vmatpush1.msra.mxu0 %v35
  %67 = vmatprep.subr.mxu0 0.0
  %68 = vmatpush1.msra.mxu0 %v34
  %69 = vmatprep.subr.mxu0 0.0
  %70 = vmatpush1.msra.mxu0 %v33
  %71 = vmatprep.subr.mxu0 0.0
  %72 = vmatpush1.msra.mxu0 %v32
  %73 = vmatprep.subr.mxu0 0.0
  %74 = vmatpush1.msra.mxu0 %v31
  %75 = vmatprep.subr.mxu0 0.0
  %76 = vmatpush1.msra.mxu0 %v30
  %77 = vmatprep.subr.mxu0 0.0
  %78 = vmatpush1.msra.mxu0 %v29
  %79 = vmatprep.subr.mxu0 0.0
  %80 = vmatpush2.msra.mxu0 0.0
  %81 = vmatprep.subr.mxu0 0.0
  %82 = vmatpush2.msra.mxu0 0.0
  %83 = vmatprep.subr.mxu0 0.0
  %84 = vmatpush2.msra.mxu0 0.0
  %85 = vmatprep.subr.mxu0 0.0
  %86 = vmatpush2.msra.mxu0 0.0
  %87 = vmatprep.subr.mxu0 0.0
  %88 = vmatpush2.msra.mxu0 0.0
  %89 = vmatprep.subr.mxu0 0.0
  %90 = vmatpush2.msra.mxu0 0.0
  %91 = vmatprep.subr.mxu0 0.0
  %92 = vmatpush2.msra.mxu0 0.0
  %93 = vmatprep.subr.mxu0 0.0
  %94 = vmatpush2.msra.mxu0 0.0
  %95 = vmatprep.subr.mxu0 0.0
  %96 = vmatpush2.msra.mxu0 0.0
  %97 = vmatprep.subr.mxu0 0.0
  %98 = vmatpush2.msra.mxu0 0.0
  %99 = vmatprep.subr.mxu0 0.0
  %100 = vmatpush2.msra.mxu0 0.0
  %101 = vmatprep.subr.mxu0 0.0
  %102 = vmatpush2.msra.mxu0 0.0
  %103 = vmatprep.subr.mxu0 0.0
  %104 = vmatpush2.msra.mxu0 0.0
  %105 = vmatprep.subr.mxu0 0.0
  %106 = vmatpush2.msra.mxu0 0.0
  %107 = vmatprep.subr.mxu0 0.0
  %108 = vmatpush2.msra.mxu0 0.0
  %109 = vmatprep.subr.mxu0 0.0
  %110 = vmatpush2.msra.mxu0 0.0
  %111 = vmatprep.mubr.f32.mxu0 0.0
  %112 = vmatmul.mubr.f32.gmra.mxu0 %v27
  %v113 = vpop.f32.mrf.mxu0
  %v114 = vadd.f32 0.0, %v113
  %v115 = vpop.f32.mrf.mxu0
  %116 = vmatprep.mubr.f32.mxu0 0.0
  %117 = vmatmul.mubr.f32.gmra.mxu0 %v28
  %v118 = vpop.f32.mrf.mxu0
  %v119 = vadd.f32 0.0, %v118
  %v120 = vpop.f32.mrf.mxu0
  %121 = vdwg.mxu0
  %v122 = vadd.f32 %v45, %v114
  %v123 = vadd.f32 %v46, %v119
  %124 = vst [vmem:[%s3] sm:$0xff] %v122
  %125 = vst [vmem:[%s3 + $0x8] sm:$0xff] %v123
  // Predicated region
  $region18: #{conv1d.1} parent=0 // pred_check
    _
  $region19: #{conv1d.1} parent=0 // pred_check_branch
    %127 = sbr.rel (0) target = $region21
  $region20: #{conv1d.1} parent=0 // pred_region
    _
  $region21: #{conv1d.1} parent=0 // pred_fallthru
    _
  // Predicated region
  $region22: #{conv1d.1} parent=0 // pred_check
    _
  $region23: #{conv1d.1} parent=0 // pred_check_branch
    %129 = sbr.rel (0) target = $region25
  $region24: #{conv1d.1} parent=0 // pred_region
    _
  $region25: #{conv1d.1} parent=0 // pred_fallthru
    _

</llo_original>
